<compile_context>
chip_gen: v7x
topology: tpu7x:2x2x1
jax: 0.10.0
libtpu: 0.0.40
codegen_flags: <defaults>
</compile_context>

<pallas_src>
import functools

import jax
import jax.numpy as jnp
from jax.experimental import pallas as pl
from jax.experimental.pallas import tpu as pltpu


def _vnet_kernel(x_ref, w1_ref, w2_ref, packed_ref, b3_ref, o_ref, *, mxu_dtype):
    # x_ref     : (TB, obs_dim)  batch tile straight from HBM (no wrapper transpose)
    # w1_ref    : (H, obs_dim)   PyTorch (out, in) layout, grid-resident
    # w2_ref    : (H, H)         grid-resident
    # packed_ref: (H, 3)         columns = [b1 | b2 | w3]
    # b3_ref    : (1,)           scalar in SMEM
    # o_ref     : (1, TB)        lane-dense output tile (batch on lanes)
    packed = packed_ref[...]
    b1 = packed[:, 0:1]          # (H, 1), broadcasts along lanes
    b2 = packed[:, 1:2]
    w3 = packed[:, 2:3]

    x = x_ref[...].astype(mxu_dtype)
    w1 = w1_ref[...].astype(mxu_dtype)
    # Layer 1: w1 @ x^T, contracting obs_dim (the last dim of both operands).
    # Puts batch on the lane axis without any wrapper-side transpose of obs.
    h1 = jax.lax.dot_general(
        w1, x, (((1,), (1,)), ((), ())),
        preferred_element_type=jnp.float32)                      # (H, TB) f32
    h1 = jnp.maximum(h1 + b1, 0.0)

    w2 = w2_ref[...].astype(mxu_dtype)
    h2 = jnp.dot(w2, h1.astype(mxu_dtype),
                 preferred_element_type=jnp.float32)             # (H, TB) f32
    h2 = jnp.maximum(h2 + b2, 0.0)

    # Layer 3 (H -> 1): VPU multiply + sublane reduce (avoids an N=1 MXU op).
    out = jnp.sum(h2 * w3, axis=0, keepdims=True) + b3_ref[0]    # (1, TB)
    o_ref[...] = out.astype(o_ref.dtype)


def _auto_block_b(batch):
    # Multiple of 128 lanes; big enough to amortize the ~0.35 us per-step
    # pipeline overhead, capped at 4096 (obs tile + (64, TB) intermediates
    # stay a few MiB, far under every generation's VMEM), and chosen so that
    # there are >= 2 grid steps whenever batch > 128 (v7x: both TensorCores).
    return int(min(4096, max(128, 128 * pl.cdiv(batch, 2 * 128))))


@functools.partial(jax.jit, static_argnames=("block_b", "mxu_dtype"))
def vnetwork_forward(obs, params, *, block_b=None, mxu_dtype=jnp.bfloat16):
    """obs: (B, obs_dim) float32.  Returns (B, 1) float32.

    block_b : batch tile (lane width per grid step); None -> auto from B.
    mxu_dtype: dtype of the matmul operands inside the kernel (accumulation is
               always f32).  bf16 uses the MXU's native path; jnp.float32 gives
               results tight to the f32 reference.
    """
    w1, b1, w2, b2, w3, b3 = params          # PyTorch (out, in) weight layout
    B, obs_dim = obs.shape
    hidden = w1.shape[0]

    if block_b is None:
        block_b = _auto_block_b(B)
    n_blocks = pl.cdiv(B, block_b)           # ragged edge tile handled by Pallas

    # Pack the tiny per-layer vectors into one resident (hidden, 3) array:
    # one DMA stream instead of three.  b3 is a true scalar -> SMEM.
    packed = jnp.stack([b1, b2, w3.reshape(hidden)], axis=1)     # (H, 3)
    b3s = b3.reshape(1,)

    kernel = functools.partial(_vnet_kernel, mxu_dtype=mxu_dtype)

    flops = 2 * B * (obs_dim * hidden + hidden * hidden + hidden)
    bytes_accessed = 4 * (obs.size + w1.size + w2.size + packed.size + 1 + B)

    out_row = pl.pallas_call(
        kernel,
        out_shape=jax.ShapeDtypeStruct((1, B), jnp.float32),
        grid_spec=pltpu.PrefetchScalarGridSpec(
            num_scalar_prefetch=0,
            grid=(n_blocks,),
            in_specs=[
                pl.BlockSpec((block_b, obs_dim), lambda i: (i, 0)),   # obs tile
                pl.BlockSpec((hidden, obs_dim), lambda i: (0, 0)),    # w1 (resident)
                pl.BlockSpec((hidden, hidden), lambda i: (0, 0)),     # w2 (resident)
                pl.BlockSpec((hidden, 3), lambda i: (0, 0)),          # [b1|b2|w3]
                pl.BlockSpec(memory_space=pltpu.MemorySpace.SMEM),    # b3 scalar
            ],
            out_specs=pl.BlockSpec((1, block_b), lambda i: (0, i)),   # lane-dense
        ),
        compiler_params=pltpu.CompilerParams(
            dimension_semantics=("parallel",),
        ),
        cost_estimate=pl.CostEstimate(
            flops=int(flops), transcendentals=0,
            bytes_accessed=int(bytes_accessed)),
    )(obs, w1, w2, packed, b3s)

    # Layout plumbing back to the PyTorch-shaped (B, 1) result (B floats only).
    return out_row[0].reshape(B, 1)


def init_vnetwork_params(key, obs_dim, hidden=64):
    """nn.Linear-style init, weights kept in PyTorch (out_features, in_features)."""
    ks = jax.random.split(key, 6)

    def linear(kw, kb, fan_in, fan_out):
        bound = 1.0 / jnp.sqrt(jnp.float32(fan_in))
        w = jax.random.uniform(kw, (fan_out, fan_in), jnp.float32, -bound, bound)
        b = jax.random.uniform(kb, (fan_out,), jnp.float32, -bound, bound)
        return w, b

    w1, b1 = linear(ks[0], ks[1], obs_dim, hidden)
    w2, b2 = linear(ks[2], ks[3], hidden, hidden)
    w3, b3 = linear(ks[4], ks[5], hidden, 1)
    return (w1, b1, w2, b2, w3, b3)


def _reference_forward(obs, params):
    w1, b1, w2, b2, w3, b3 = params
    h1 = jnp.maximum(obs @ w1.T + b1, 0.0)
    h2 = jnp.maximum(h1 @ w2.T + b2, 0.0)
    return h2 @ w3.T + b3


if __name__ == "__main__":
    key = jax.random.PRNGKey(0)
    k_obs, k_params = jax.random.split(key)

    B, OBS_DIM = 200, 32                     # B deliberately not a multiple of the tile
    obs = jax.random.normal(k_obs, (B, OBS_DIM), dtype=jnp.float32)
    params = init_vnetwork_params(k_params, OBS_DIM, hidden=64)

    ref = _reference_forward(obs, params)

    # Default path: auto tile (block_b=128 here -> 2 grid steps, ragged edge)
    # with bf16 MXU operands; tolerance sized for bf16 inputs + f32 accumulation.
    out = jax.block_until_ready(vnetwork_forward(obs, params))
    assert out.shape == (B, 1), out.shape
    assert jnp.allclose(out, ref, atol=5e-2, rtol=5e-2), "mismatch vs reference (bf16 MXU)"

    # f32 MXU path: tight against the f32 reference.
    out_f32 = jax.block_until_ready(
        vnetwork_forward(obs, params, mxu_dtype=jnp.float32))
    assert out_f32.shape == (B, 1), out_f32.shape
    assert jnp.allclose(out_f32, ref, atol=1e-4, rtol=1e-4), "mismatch vs reference (f32 MXU)"

    # Explicit larger tile: single ragged grid step (block > remaining batch).
    out_big = jax.block_until_ready(
        vnetwork_forward(obs, params, block_b=512, mxu_dtype=jnp.float32))
    assert out_big.shape == (B, 1), out_big.shape
    assert jnp.allclose(out_big, ref, atol=1e-4, rtol=1e-4), "mismatch vs reference (block_b=512)"

    print("KERNEL_OK")
</pallas_src>

<mosaic_0001>
module attributes {stable_mosaic.version = 11 : i64} {
  func.func @_vnet_kernel(%arg0: i32, %arg1: memref<128x32xf32, #tpu.memory_space<vmem>>, %arg2: memref<64x32xf32, #tpu.memory_space<vmem>>, %arg3: memref<64x64xf32, #tpu.memory_space<vmem>>, %arg4: memref<64x3xf32, #tpu.memory_space<vmem>>, %arg5: memref<1xf32, #tpu.memory_space<smem>>, %arg6: memref<1x128xf32, #tpu.memory_space<vmem>>) attributes {dimension_semantics = [#tpu.dimension_semantics<parallel>], iteration_bounds = array<i64: 2>, scalar_prefetch = 0 : i64, scratch_operands = 0 : i64, tpu.core_type = #tpu.core_type<tc>, window_params = [{transform_indices = @transform_0, window_bounds = array<i64: 128, 32>}, {pipeline_mode = #tpu.pipeline_mode<synchronous>, transform_indices = @transform_1, window_bounds = array<i64: 64, 32>}, {pipeline_mode = #tpu.pipeline_mode<synchronous>, transform_indices = @transform_2, window_bounds = array<i64: 64, 64>}, {pipeline_mode = #tpu.pipeline_mode<synchronous>, transform_indices = @transform_3, window_bounds = array<i64: 64, 3>}, {transform_indices = @transform_4, window_bounds = array<i64: 1>}, {transform_indices = @transform_5, window_bounds = array<i64: 1, 128>}]} {
    %c0 = arith.constant 0 : index
    %c0_0 = arith.constant 0 : index
    %0 = vector.load %arg4[%c0, %c0_0] : memref<64x3xf32, #tpu.memory_space<vmem>>, vector<64x3xf32>
    %1 = vector.extract_strided_slice %0 {offsets = [0, 0], sizes = [64, 1], strides = [1, 1]} : vector<64x3xf32> to vector<64x1xf32>
    %2 = vector.extract_strided_slice %0 {offsets = [0, 1], sizes = [64, 1], strides = [1, 1]} : vector<64x3xf32> to vector<64x1xf32>
    %3 = vector.extract_strided_slice %0 {offsets = [0, 2], sizes = [64, 1], strides = [1, 1]} : vector<64x3xf32> to vector<64x1xf32>
    %c0_1 = arith.constant 0 : index
    %c0_2 = arith.constant 0 : index
    %4 = vector.load %arg1[%c0_1, %c0_2] : memref<128x32xf32, #tpu.memory_space<vmem>>, vector<128x32xf32>
    %5 = arith.truncf %4 : vector<128x32xf32> to vector<128x32xbf16>
    %c0_3 = arith.constant 0 : index
    %c0_4 = arith.constant 0 : index
    %6 = vector.load %arg2[%c0_3, %c0_4] : memref<64x32xf32, #tpu.memory_space<vmem>>, vector<64x32xf32>
    %7 = arith.truncf %6 : vector<64x32xf32> to vector<64x32xbf16>
    %cst = arith.constant dense<0.000000e+00> : vector<64x128xf32>
    %8 = tpu.matmul %7, %5, %cst {dimension_numbers = #tpu.dot_dimension_numbers<[1], [1], [0], [0], [0, 0, 1, 0], [], []>} : vector<64x32xbf16>, vector<128x32xbf16>, vector<64x128xf32> -> vector<64x128xf32>
    %9 = vector.broadcast %1 : vector<64x1xf32> to vector<64x128xf32>
    %10 = arith.addf %8, %9 : vector<64x128xf32>
    %cst_5 = arith.constant 0.000000e+00 : f32
    %11 = vector.broadcast %cst_5 : f32 to vector<64x128xf32>
    %12 = arith.maximumf %10, %11 : vector<64x128xf32>
    %c0_6 = arith.constant 0 : index
    %c0_7 = arith.constant 0 : index
    %13 = vector.load %arg3[%c0_6, %c0_7] : memref<64x64xf32, #tpu.memory_space<vmem>>, vector<64x64xf32>
    %14 = arith.truncf %13 : vector<64x64xf32> to vector<64x64xbf16>
    %15 = arith.truncf %12 : vector<64x128xf32> to vector<64x128xbf16>
    %cst_8 = arith.constant dense<0.000000e+00> : vector<64x128xf32>
    %16 = tpu.matmul %14, %15, %cst_8 {dimension_numbers = #tpu.dot_dimension_numbers<[1], [0], [0], [1], [0, 0, 1, 1], [], []>} : vector<64x64xbf16>, vector<64x128xbf16>, vector<64x128xf32> -> vector<64x128xf32>
    %17 = vector.broadcast %2 : vector<64x1xf32> to vector<64x128xf32>
    %18 = arith.addf %16, %17 : vector<64x128xf32>
    %cst_9 = arith.constant 0.000000e+00 : f32
    %19 = vector.broadcast %cst_9 : f32 to vector<64x128xf32>
    %20 = arith.maximumf %18, %19 : vector<64x128xf32>
    %21 = vector.broadcast %3 : vector<64x1xf32> to vector<64x128xf32>
    %22 = arith.mulf %20, %21 : vector<64x128xf32>
    %cst_10 = arith.constant dense<0.000000e+00> : vector<128xf32>
    %23 = vector.multi_reduction <add>, %22, %cst_10 [0] : vector<64x128xf32> to vector<128xf32>
    %24 = vector.shape_cast %23 : vector<128xf32> to vector<1x128xf32>
    %c0_11 = arith.constant 0 : index
    %25 = memref.load %arg5[%c0_11] : memref<1xf32, #tpu.memory_space<smem>>
    %26 = vector.broadcast %25 : f32 to vector<1x128xf32>
    %27 = arith.addf %24, %26 : vector<1x128xf32>
    %c0_12 = arith.constant 0 : index
    %c0_13 = arith.constant 0 : index
    %28 = vector.load %arg6[%c0_12, %c0_13] : memref<1x128xf32, #tpu.memory_space<vmem>>, vector<1x128xf32>
    tpu.vector_store %arg6[%c0_12, %c0_13], %27 {strides = array<i32>} : memref<1x128xf32, #tpu.memory_space<vmem>>, vector<1x128xf32>,
    return
  }
  func.func @transform_0(%arg0: i32) -> (i32, i32) {
    %c0_i32 = arith.constant 0 : i32
    %c0_i32_0 = arith.constant 0 : i32
    return %arg0, %c0_i32 : i32, i32
  }
  func.func @transform_1(%arg0: i32) -> (i32, i32) {
    %c0_i32 = arith.constant 0 : i32
    %c0_i32_0 = arith.constant 0 : i32
    %c0_i32_1 = arith.constant 0 : i32
    return %c0_i32, %c0_i32_0 : i32, i32
  }
  func.func @transform_2(%arg0: i32) -> (i32, i32) {
    %c0_i32 = arith.constant 0 : i32
    %c0_i32_0 = arith.constant 0 : i32
    %c0_i32_1 = arith.constant 0 : i32
    return %c0_i32, %c0_i32_0 : i32, i32
  }
  func.func @transform_3(%arg0: i32) -> (i32, i32) {
    %c0_i32 = arith.constant 0 : i32
    %c0_i32_0 = arith.constant 0 : i32
    %c0_i32_1 = arith.constant 0 : i32
    return %c0_i32, %c0_i32_0 : i32, i32
  }
  func.func @transform_4(%arg0: i32) -> i32 {
    %c0_i32 = arith.constant 0 : i32
    %c0_i32_0 = arith.constant 0 : i32
    return %c0_i32 : i32
  }
  func.func @transform_5(%arg0: i32) -> (i32, i32) {
    %c0_i32 = arith.constant 0 : i32
    %c0_i32_0 = arith.constant 0 : i32
    return %c0_i32, %arg0 : i32, i32
  }
}

</mosaic_0001>

<llo_original>
// kernel: vnetwork_forward.1
$region0: #{vnetwork_forward.1}
  #allocation0 [shape = 'u32[]', space=smem, size = 0x4, offset = 0x4, fixed_abs, tag = 'smem constant byte address 0x4 - core index']
  #allocation1 [shape = 'u32[144,128]{1,0:T(1,128)}', space=vmem, size = 0x12000, scoped, tag = 'internal scratch']
  #allocation2 [shape = 'f32[1]{0:T(128)S(6)}', space=smem, size = 0x200, scoped, tag = 'scoped memory for vnetwork_forward.1']
  %s0 = inlined_call_operand.vmem [shape: f32[200,32], index: 0, kind: input, shape index: {}]
  %s1 = inlined_call_operand.vmem [shape: f32[64,32], index: 1, kind: input, shape index: {}]
  %s2 = inlined_call_operand.vmem [shape: f32[64,64], index: 2, kind: input, shape index: {}]
  %s3 = inlined_call_operand.vmem [shape: f32[64,3], index: 3, kind: input, shape index: {}]
  %s4 = inlined_call_operand.<no memory space> [shape: f32[1], index: 4, kind: input, shape index: {}]
  %s5 = inlined_call_operand.hbm [shape: f32[1,200], index: 5, kind: output, shape index: {}]
  %s6 = sld [smem:[#allocation0]]
  $region53: #{vnetwork_forward.1} parent=0
    _
  %s8 = ssub.s32 1, %s6
  %s9 = scalar_select 0, %s8, %s6
  %10 = sst [smem:[#allocation2]] %s4
  $region1: #{vnetwork_forward.1} parent=0
    #allocation3 [shape = 'u8[1024]{0}', space=vmem, size = 0x400, scoped, tag = 'output window, operand 0']
    #allocation4 [shape = 's32[2]{0}', space=sflag, size = 0x8, scoped, tag = 'scoped memory for vnetwork_forward.1']
    %11 = vsyncpa [#allocation4], 0
    %s12 = scalar_lea.sflag [#allocation4], 1
    %13 = vsyncpa %s12, 0
    loop: start=0, step=1, limit=4
    $region2: #{vnetwork_forward.1} parent=1 // loop_pre_header
      _
    $region3: #{vnetwork_forward.1} parent=1 // loop_header
      %s15 = sphi 0, %s19
      %p16 = scmp.ge.s32.totalorder %s15, 4
      %s25 = sphi 0, %s27
      %s28 = sphi 0, %s25
      %s29 = sphi 0, %s28
      %s45 = sphi 0, %s29
      %s49 = sphi 0, %s49
      %s51 = sphi 0, %s49
      %s52 = sphi 0, %s51
      %s66 = sphi 0, %s52
      %s70 = sphi 0, %s70
      %s72 = sphi 0, %s70
      %s73 = sphi 0, %s72
      %s87 = sphi 0, %s73
      %s91 = sphi 0, %s91
      %s93 = sphi 0, %s91
      %s94 = sphi 0, %s93
      %s108 = sphi 0, %s94
      %s112 = sphi 0, %s112
      %s114 = sphi 0, %s112
      %s115 = sphi 0, %s114
      %s129 = sphi 0, %s115
      %s135 = sphi 0, %s137
      %s138 = sphi 0, %s135
      %s139 = sphi 0, %s138
      %s155 = sphi 0, %s139
    $region4: #{vnetwork_forward.1} parent=1 // loop_header_branch
      %18 = sbr.rel (%p16) target = $region8
    $region5: #{vnetwork_forward.1} parent=1 // loop_body
      %s20 = ssub.s32 %s15, 1
      %s21 = ssub.s32 %s15, 2
      %s22 = sadd.s32 %s15, 1
      %s23 = ssub.s32 %s15, %s22
      %p24 = scmp.eq.s32.totalorder %s23, 0
      %s26 = sadd.s32 %s25, 1
      %s27 = scalar_select %p24, %s25, %s26
      %p30 = pneg %p24
      %p31 = scmp.eq.s32.totalorder %s15, 1
      %p32 = por %p30, %p31
      %p33 = scmp.ne.s32.totalorder %s25, %s28
      %p34 = scmp.eq.s32.totalorder %s15, 0
      %p35 = por %p33, %p34
      %p36 = scmp.ne.s32.totalorder %s25, %s28
      %p37 = scmp.eq.s32.totalorder %s20, 1
      %p38 = por %p36, %p37
      %p39 = scmp.ne.s32.totalorder %s28, %s29
      %p40 = scmp.eq.s32.totalorder %s20, 0
      %p41 = por %p39, %p40
      %p42 = scmp.ne.s32.totalorder %s28, %s29
      %p43 = scmp.eq.s32.totalorder %s21, 1
      %p44 = por %p42, %p43
      %p46 = scmp.ne.s32.totalorder %s29, %s45
      %p47 = scmp.eq.s32.totalorder %s21, 0
      %p48 = por %p46, %p47
      %s50 = sadd.s32 %s49, 1
      %p53 = scmp.eq.s32.totalorder %s15, 1
      %p54 = scmp.ne.s32.totalorder %s49, %s51
      %p55 = scmp.eq.s32.totalorder %s15, 0
      %p56 = por %p54, %p55
      %p57 = scmp.ne.s32.totalorder %s49, %s51
      %p58 = scmp.eq.s32.totalorder %s20, 1
      %p59 = por %p57, %p58
      %p60 = scmp.ne.s32.totalorder %s51, %s52
      %p61 = scmp.eq.s32.totalorder %s20, 0
      %p62 = por %p60, %p61
      %p63 = scmp.ne.s32.totalorder %s51, %s52
      %p64 = scmp.eq.s32.totalorder %s21, 1
      %p65 = por %p63, %p64
      %p67 = scmp.ne.s32.totalorder %s52, %s66
      %p68 = scmp.eq.s32.totalorder %s21, 0
      %p69 = por %p67, %p68
      %s71 = sadd.s32 %s70, 1
      %p74 = scmp.eq.s32.totalorder %s15, 1
      %p75 = scmp.ne.s32.totalorder %s70, %s72
      %p76 = scmp.eq.s32.totalorder %s15, 0
      %p77 = por %p75, %p76
      %p78 = scmp.ne.s32.totalorder %s70, %s72
      %p79 = scmp.eq.s32.totalorder %s20, 1
      %p80 = por %p78, %p79
      %p81 = scmp.ne.s32.totalorder %s72, %s73
      %p82 = scmp.eq.s32.totalorder %s20, 0
      %p83 = por %p81, %p82
      %p84 = scmp.ne.s32.totalorder %s72, %s73
      %p85 = scmp.eq.s32.totalorder %s21, 1
      %p86 = por %p84, %p85
      %p88 = scmp.ne.s32.totalorder %s73, %s87
      %p89 = scmp.eq.s32.totalorder %s21, 0
      %p90 = por %p88, %p89
      %s92 = sadd.s32 %s91, 1
      %p95 = scmp.eq.s32.totalorder %s15, 1
      %p96 = scmp.ne.s32.totalorder %s91, %s93
      %p97 = scmp.eq.s32.totalorder %s15, 0
      %p98 = por %p96, %p97
      %p99 = scmp.ne.s32.totalorder %s91, %s93
      %p100 = scmp.eq.s32.totalorder %s20, 1
      %p101 = por %p99, %p100
      %p102 = scmp.ne.s32.totalorder %s93, %s94
      %p103 = scmp.eq.s32.totalorder %s20, 0
      %p104 = por %p102, %p103
      %p105 = scmp.ne.s32.totalorder %s93, %s94
      %p106 = scmp.eq.s32.totalorder %s21, 1
      %p107 = por %p105, %p106
      %p109 = scmp.ne.s32.totalorder %s94, %s108
      %p110 = scmp.eq.s32.totalorder %s21, 0
      %p111 = por %p109, %p110
      %s113 = sadd.s32 %s112, 1
      %p116 = scmp.eq.s32.totalorder %s15, 1
      %p117 = scmp.ne.s32.totalorder %s112, %s114
      %p118 = scmp.eq.s32.totalorder %s15, 0
      %p119 = por %p117, %p118
      %p120 = scmp.ne.s32.totalorder %s112, %s114
      %p121 = scmp.eq.s32.totalorder %s20, 1
      %p122 = por %p120, %p121
      %p123 = scmp.ne.s32.totalorder %s114, %s115
      %p124 = scmp.eq.s32.totalorder %s20, 0
      %p125 = por %p123, %p124
      %p126 = scmp.ne.s32.totalorder %s114, %s115
      %p127 = scmp.eq.s32.totalorder %s21, 1
      %p128 = por %p126, %p127
      %p130 = scmp.ne.s32.totalorder %s115, %s129
      %p131 = scmp.eq.s32.totalorder %s21, 0
      %p132 = por %p130, %p131
      %s133 = ssub.s32 %s15, %s22
      %p134 = scmp.eq.s32.totalorder %s133, 0
      %s136 = sadd.s32 %s135, 1
      %s137 = scalar_select %p134, %s135, %s136
      %p140 = pneg %p134
      %p141 = scmp.eq.s32.totalorder %s15, 1
      %p142 = por %p140, %p141
      %p143 = scmp.ne.s32.totalorder %s135, %s138
      %p144 = scmp.eq.s32.totalorder %s15, 0
      %p145 = por %p143, %p144
      %p146 = scmp.ne.s32.totalorder %s135, %s138
      %p147 = scmp.eq.s32.totalorder %s20, 1
      %p148 = por %p146, %p147
      %p149 = scmp.ne.s32.totalorder %s138, %s139
      %p150 = scmp.eq.s32.totalorder %s20, 0
      %p151 = por %p149, %p150
      %p152 = scmp.ne.s32.totalorder %s138, %s139
      %p153 = scmp.eq.s32.totalorder %s21, 1
      %p154 = por %p152, %p153
      %p156 = scmp.ne.s32.totalorder %s139, %s155
      %p157 = scmp.eq.s32.totalorder %s21, 0
      %p158 = por %p156, %p157
      %p159 = scmp.le.s32.totalorder 1, %s15
      %p160 = scmp.lt.s32.totalorder %s15, 3
      %p161 = pnand %p159, %p160
      %p162 = pneg %p161
      // Predicated region
      $region9: #{vnetwork_forward.1} parent=5 // pred_check
        _
      $region10: #{vnetwork_forward.1} parent=5 // pred_check_branch
        %164 = sbr.rel (%p161) target = $region12
      $region11: #{vnetwork_forward.1} parent=5 // pred_region
        %s165 = ssub.s32 %s15, 1
        // Predicated region
        $region13: #{vnetwork_forward.1} parent=11 // pred_check
          %p166 = pneg %p62
        $region14: #{vnetwork_forward.1} parent=11 // pred_check_branch
          %168 = sbr.rel (%p166) target = $region16
        $region15: #{vnetwork_forward.1} parent=11 // pred_region
          _
        $region16: #{vnetwork_forward.1} parent=11 // pred_fallthru
          _
        // Predicated region
        $region17: #{vnetwork_forward.1} parent=11 // pred_check
          %p169 = pneg %p83
        $region18: #{vnetwork_forward.1} parent=11 // pred_check_branch
          %171 = sbr.rel (%p169) target = $region20
        $region19: #{vnetwork_forward.1} parent=11 // pred_region
          _
        $region20: #{vnetwork_forward.1} parent=11 // pred_fallthru
          _
        // Predicated region
        $region21: #{vnetwork_forward.1} parent=11 // pred_check
          %p172 = pneg %p104
        $region22: #{vnetwork_forward.1} parent=11 // pred_check_branch
          %174 = sbr.rel (%p172) target = $region24
        $region23: #{vnetwork_forward.1} parent=11 // pred_region
          _
        $region24: #{vnetwork_forward.1} parent=11 // pred_fallthru
          _
        // Predicated region
        $region25: #{vnetwork_forward.1} parent=11 // pred_check
          %p175 = pneg %p125
        $region26: #{vnetwork_forward.1} parent=11 // pred_check_branch
          %177 = sbr.rel (%p175) target = $region28
        $region27: #{vnetwork_forward.1} parent=11 // pred_region
          _
        $region28: #{vnetwork_forward.1} parent=11 // pred_fallthru
          _
      $region12: #{vnetwork_forward.1} parent=5 // pred_fallthru
        _
      %p178 = scmp.lt.s32.totalorder %s15, 2
      // Predicated region
      $region29: #{vnetwork_forward.1} parent=5 // pred_check
        %p179 = pneg %p178
      $region30: #{vnetwork_forward.1} parent=5 // pred_check_branch
        %181 = sbr.rel (%p179) target = $region32
      $region31: #{vnetwork_forward.1} parent=5 // pred_region
        // Predicated region
        $region33: #{vnetwork_forward.1} parent=31 // pred_check
          %p182 = pneg %p35
        $region34: #{vnetwork_forward.1} parent=31 // pred_check_branch
          %184 = sbr.rel (%p182) target = $region36
        $region35: #{vnetwork_forward.1} parent=31 // pred_region
          %s185 = smul.u32 16, %s15
          %s186 = ssub.s32 25, %s185
          %p187 = scmp.lt.s32.totalorder %s186, 16
          %s188 = scalar_select %p187, %s186, 16
          %s189 = smul.u32 128, %s188
          %p190 = scmp.lt.s32.totalorder %s185, 24
          %s191 = scalar_select %p190, %s185, 24
          %s192 = smul.addr %s191, 8
          %s193 = scalar_lea.vmem %s0, %s192
          %s194 = smul.u32 16, %s15
          %s195 = ssub.s32 25, %s194
          %p196 = scmp.lt.s32.totalorder %s195, 16
          %s197 = scalar_select %p196, %s195, 16
          %s198 = smul.u32 128, %s197
        $region36: #{vnetwork_forward.1} parent=31 // pred_fallthru
          _
      $region32: #{vnetwork_forward.1} parent=5 // pred_fallthru
        _
      %p199 = scmp.le.s32.totalorder 1, %s15
      %p200 = scmp.lt.s32.totalorder %s15, 3
      %p201 = pnand %p199, %p200
      %p202 = pneg %p201
      // Predicated region
      $region37: #{vnetwork_forward.1} parent=5 // pred_check
        _
      $region38: #{vnetwork_forward.1} parent=5 // pred_check_branch
        %204 = sbr.rel (%p201) target = $region40
      $region39: #{vnetwork_forward.1} parent=5 // pred_region
        %s205 = ssub.s32 %s15, 1
        %s206 = smul.u32 16, %s20
        %s207 = ssub.s32 25, %s206
        %p208 = scmp.lt.s32.totalorder %s207, 16
        %s209 = scalar_select %p208, %s207, 16
        %s210 = smul.u32 128, %s209
        %p211 = scmp.lt.s32.totalorder %s206, 24
        %s212 = scalar_select %p211, %s206, 24
        %s213 = smul.addr %s212, 8
        %s214 = scalar_lea.vmem %s0, %s213
        %p215 = pneg %p41
        %p216 = pneg %p38
        %p217 = pneg %p62
        %p218 = pneg %p59
        %p219 = pneg %p83
        %p220 = pneg %p80
        %p221 = pneg %p104
        %p222 = pneg %p101
        %p223 = pneg %p125
        %p224 = pneg %p122
        %p225 = pneg %p151
        %p226 = pneg %p148
        %s227 = sand.u32 %s138, 1
        %s228 = scalar_lea.sflag [#allocation4], %s227
        %s229 = sand.u32 %s138, 1
        %s230 = scalar_lea.vmem [#allocation3], %s229
        %s231 = smul.u32 16, %s20
        %s232 = ssub.s32 25, %s231
        %p233 = scmp.lt.s32.totalorder %s232, 16
        %s234 = scalar_select %p233, %s232, 16
        %s235 = smul.u32 128, %s234
        %p236 = scmp.lt.s32.totalorder %s231, 24
        %s237 = scalar_select %p236, %s231, 24
        %s238 = smul.addr %s237, 8
        %s239 = scalar_lea.vmem %s0, %s238
        %s240 = smul.u32 16, %s20
        %s241 = ssub.s32 25, %s240
        %p242 = scmp.lt.s32.totalorder %s241, 16
        %s243 = scalar_select %p242, %s241, 16
        %s244 = smul.u32 128, %s243
        %v246 = vld [vmem:[%s3] sm:$0xff]
        %v247 = vld [vmem:[%s3 + $0x8] sm:$0xff]
        %v248 = vld [vmem:[%s3 + $0x10] sm:$0xff]
        %v249 = vld [vmem:[%s3 + $0x18] sm:$0xff]
        %v250 = vld [vmem:[%s3 + $0x20] sm:$0xff]
        %v251 = vld [vmem:[%s3 + $0x28] sm:$0xff]
        %v252 = vld [vmem:[%s3 + $0x30] sm:$0xff]
        %v253 = vld [vmem:[%s3 + $0x38] sm:$0xff]
        %v254 = vld [vmem:[%s239] sm:$0xff]
        %v255 = vld [vmem:[%s239 + $0x8] sm:$0xff]
        %v256 = vld [vmem:[%s239 + $0x10] sm:$0xff]
        %v257 = vld [vmem:[%s239 + $0x18] sm:$0xff]
        %v258 = vld [vmem:[%s239 + $0x20] sm:$0xff]
        %v259 = vld [vmem:[%s239 + $0x28] sm:$0xff]
        %v260 = vld [vmem:[%s239 + $0x30] sm:$0xff]
        %v261 = vld [vmem:[%s239 + $0x38] sm:$0xff]
        %v262 = vld [vmem:[%s239 + $0x40] sm:$0xff]
        %v263 = vld [vmem:[%s239 + $0x48] sm:$0xff]
        %v264 = vld [vmem:[%s239 + $0x50] sm:$0xff]
        %v265 = vld [vmem:[%s239 + $0x58] sm:$0xff]
        %v266 = vld [vmem:[%s239 + $0x60] sm:$0xff]
        %v267 = vld [vmem:[%s239 + $0x68] sm:$0xff]
        %v268 = vld [vmem:[%s239 + $0x70] sm:$0xff]
        %v269 = vld [vmem:[%s239 + $0x78] sm:$0xff]
        %v270 = vpack.c.bf16 %v255, %v254
        %v271 = vpack.c.bf16 %v257, %v256
        %v272 = vpack.c.bf16 %v259, %v258
        %v273 = vpack.c.bf16 %v261, %v260
        %v274 = vpack.c.bf16 %v263, %v262
        %v275 = vpack.c.bf16 %v265, %v264
        %v276 = vpack.c.bf16 %v267, %v266
        %v277 = vpack.c.bf16 %v269, %v268
        %v278 = vld [vmem:[%s1] sm:$0xff]
        %v279 = vld [vmem:[%s1 + $0x8] sm:$0xff]
        %v280 = vld [vmem:[%s1 + $0x10] sm:$0xff]
        %v281 = vld [vmem:[%s1 + $0x18] sm:$0xff]
        %v282 = vld [vmem:[%s1 + $0x20] sm:$0xff]
        %v283 = vld [vmem:[%s1 + $0x28] sm:$0xff]
        %v284 = vld [vmem:[%s1 + $0x30] sm:$0xff]
        %v285 = vld [vmem:[%s1 + $0x38] sm:$0xff]
        %v286 = vpack.c.bf16 %v279, %v278
        %v287 = vpack.c.bf16 %v281, %v280
        %v288 = vpack.c.bf16 %v283, %v282
        %v289 = vpack.c.bf16 %v285, %v284
        %291 = vset.pattern.permute.xlu0 0
        %292 = vperm.xlu0 %291, %v246
        %v293 = vpop.permute.xlu0 %292
        %296 = vset.pattern.permute.xlu0 0
        %297 = vperm.xlu0 %296, %v247
        %v298 = vpop.permute.xlu0 %297
        %301 = vset.pattern.permute.xlu0 0
        %302 = vperm.xlu0 %301, %v248
        %v303 = vpop.permute.xlu0 %302
        %306 = vset.pattern.permute.xlu0 0
        %307 = vperm.xlu0 %306, %v249
        %v308 = vpop.permute.xlu0 %307
        %311 = vset.pattern.permute.xlu0 0
        %312 = vperm.xlu0 %311, %v250
        %v313 = vpop.permute.xlu0 %312
        %316 = vset.pattern.permute.xlu0 0
        %317 = vperm.xlu0 %316, %v251
        %v318 = vpop.permute.xlu0 %317
        %321 = vset.pattern.permute.xlu0 0
        %322 = vperm.xlu0 %321, %v252
        %v323 = vpop.permute.xlu0 %322
        %326 = vset.pattern.permute.xlu0 0
        %327 = vperm.xlu0 %326, %v253
        %v328 = vpop.permute.xlu0 %327
        %vm330 = vcmask 261120
        %v332 = vsel %vm330, %v286, 0
        %v335 = vsel %vm330, %v287, 0
        %v338 = vsel %vm330, %v288, 0
        %v341 = vsel %vm330, %v289, 0
        %v344 = vsel %vm330, %v270, 0
        %v347 = vsel %vm330, %v271, 0
        %v350 = vsel %vm330, %v272, 0
        %v353 = vsel %vm330, %v273, 0
        %v356 = vsel %vm330, %v274, 0
        %v359 = vsel %vm330, %v275, 0
        %v362 = vsel %vm330, %v276, 0
        %v365 = vsel %vm330, %v277, 0
        %367 = vmatprep.subr.bf16.mxu0 0
        %368 = vmatpush1.bf16.xpose.msra.mxu0 %v344
        %369 = vmatprep.subr.bf16.mxu0 0
        %370 = vmatpush1.bf16.xpose.msra.mxu0 %v347
        %371 = vmatprep.subr.bf16.mxu0 0
        %372 = vmatpush1.bf16.xpose.msra.mxu0 %v350
        %373 = vmatprep.subr.bf16.mxu0 0
        %374 = vmatpush1.bf16.xpose.msra.mxu0 %v353
        %375 = vmatprep.subr.bf16.mxu0 0
        %376 = vmatpush1.bf16.xpose.msra.mxu0 %v356
        %377 = vmatprep.subr.bf16.mxu0 0
        %378 = vmatpush1.bf16.xpose.msra.mxu0 %v359
        %379 = vmatprep.subr.bf16.mxu0 0
        %380 = vmatpush1.bf16.xpose.msra.mxu0 %v362
        %381 = vmatprep.subr.bf16.mxu0 0
        %382 = vmatpush1.bf16.xpose.msra.mxu0 %v365
        %383 = vmatprep.subr.bf16.mxu0 0
        %384 = vmatpush1.bf16.xpose.msra.mxu0 0
        %385 = vmatprep.subr.bf16.mxu0 0
        %386 = vmatpush1.bf16.xpose.msra.mxu0 0
        %387 = vmatprep.subr.bf16.mxu0 0
        %388 = vmatpush1.bf16.xpose.msra.mxu0 0
        %389 = vmatprep.subr.bf16.mxu0 0
        %390 = vmatpush1.bf16.xpose.msra.mxu0 0
        %391 = vmatprep.subr.bf16.mxu0 0
        %392 = vmatpush1.bf16.xpose.msra.mxu0 0
        %393 = vmatprep.subr.bf16.mxu0 0
        %394 = vmatpush1.bf16.xpose.msra.mxu0 0
        %395 = vmatprep.subr.bf16.mxu0 0
        %396 = vmatpush1.bf16.xpose.msra.mxu0 0
        %397 = vmatprep.subr.bf16.mxu0 0
        %398 = vmatpush1.bf16.xpose.msra.mxu0 0
        %399 = vmatprep.mubr.bf16.mxu0 0
        %400 = vmatmul.mubr.bf16.gmra.mrb[0].mxu0 %v332
        %v401 = vpop.f32.mrb[0].mxu0
        %v402 = vadd.f32 %v293, %v401
        %v403 = vpop.f32.mrb[0].mxu0
        %v404 = vpop.f32.mrb[0].mxu0
        %v405 = vadd.f32 %v298, %v404
        %v406 = vpop.f32.mrb[0].mxu0
        %407 = vmatprep.mubr.bf16.mxu0 0
        %408 = vmatmul.mubr.bf16.gmra.mrb[0].mxu0 %v335
        %v409 = vpop.f32.mrb[0].mxu0
        %v410 = vadd.f32 %v303, %v409
        %v411 = vpop.f32.mrb[0].mxu0
        %v412 = vpop.f32.mrb[0].mxu0
        %v413 = vadd.f32 %v308, %v412
        %v414 = vpop.f32.mrb[0].mxu0
        %415 = vmatprep.mubr.bf16.mxu0 0
        %416 = vmatmul.mubr.bf16.gmra.mrb[0].mxu0 %v338
        %v417 = vpop.f32.mrb[0].mxu0
        %v418 = vadd.f32 %v313, %v417
        %v419 = vpop.f32.mrb[0].mxu0
        %v420 = vpop.f32.mrb[0].mxu0
        %v421 = vadd.f32 %v318, %v420
        %v422 = vpop.f32.mrb[0].mxu0
        %423 = vmatprep.mubr.bf16.mxu0 0
        %424 = vmatmul.mubr.bf16.gmra.mrb[0].mxu0 %v341
        %v425 = vpop.f32.mrb[0].mxu0
        %v426 = vadd.f32 %v323, %v425
        %v427 = vpop.f32.mrb[0].mxu0
        %v428 = vpop.f32.mrb[0].mxu0
        %v429 = vadd.f32 %v328, %v428
        %v430 = vpop.f32.mrb[0].mxu0
        %431 = vdwg.mxu0
        %v432 = vmax.f32 %v402, 0.0
        %v433 = vmax.f32 %v405, 0.0
        %v434 = vmax.f32 %v410, 0.0
        %v435 = vmax.f32 %v413, 0.0
        %v436 = vmax.f32 %v418, 0.0
        %v437 = vmax.f32 %v421, 0.0
        %v438 = vmax.f32 %v426, 0.0
        %v439 = vmax.f32 %v429, 0.0
        %v440 = vld [vmem:[%s2] sm:$0xff]
        %v441 = vld [vmem:[%s2 + $0x8] sm:$0xff]
        %v442 = vld [vmem:[%s2 + $0x10] sm:$0xff]
        %v443 = vld [vmem:[%s2 + $0x18] sm:$0xff]
        %v444 = vld [vmem:[%s2 + $0x20] sm:$0xff]
        %v445 = vld [vmem:[%s2 + $0x28] sm:$0xff]
        %v446 = vld [vmem:[%s2 + $0x30] sm:$0xff]
        %v447 = vld [vmem:[%s2 + $0x38] sm:$0xff]
        %v448 = vpack.c.bf16 %v441, %v440
        %v449 = vpack.c.bf16 %v443, %v442
        %v450 = vpack.c.bf16 %v445, %v444
        %v451 = vpack.c.bf16 %v447, %v446
        %v452 = vpack.c.bf16 %v433, %v432
        %v453 = vpack.c.bf16 %v435, %v434
        %v454 = vpack.c.bf16 %v437, %v436
        %v455 = vpack.c.bf16 %v439, %v438
        %456 = vset.pattern.permute.xlu0 1
        %457 = vperm.xlu0 %456, %v246
        %v458 = vpop.permute.xlu0 %457
        %460 = vset.pattern.permute.xlu0 1
        %461 = vperm.xlu0 %460, %v247
        %v462 = vpop.permute.xlu0 %461
        %464 = vset.pattern.permute.xlu0 1
        %465 = vperm.xlu0 %464, %v248
        %v466 = vpop.permute.xlu0 %465
        %468 = vset.pattern.permute.xlu0 1
        %469 = vperm.xlu0 %468, %v249
        %v470 = vpop.permute.xlu0 %469
        %472 = vset.pattern.permute.xlu0 1
        %473 = vperm.xlu0 %472, %v250
        %v474 = vpop.permute.xlu0 %473
        %476 = vset.pattern.permute.xlu0 1
        %477 = vperm.xlu0 %476, %v251
        %v478 = vpop.permute.xlu0 %477
        %480 = vset.pattern.permute.xlu0 1
        %481 = vperm.xlu0 %480, %v252
        %v482 = vpop.permute.xlu0 %481
        %484 = vset.pattern.permute.xlu0 1
        %485 = vperm.xlu0 %484, %v253
        %v486 = vpop.permute.xlu0 %485
        %vm488 = vcmask 523264
        %v490 = vsel %vm488, %v448, 0
        %v493 = vsel %vm488, %v449, 0
        %v496 = vsel %vm488, %v450, 0
        %v499 = vsel %vm488, %v451, 0
        %501 = vmatprep.subr.bf16.mxu0 0
        %502 = vmatpush1.bf16.msra.mxu0 %v452
        %503 = vmatprep.subr.bf16.mxu0 0
        %504 = vmatpush1.bf16.msra.mxu0 %v453
        %505 = vmatprep.subr.bf16.mxu0 0
        %506 = vmatpush1.bf16.msra.mxu0 %v454
        %507 = vmatprep.subr.bf16.mxu0 0
        %508 = vmatpush1.bf16.msra.mxu0 %v455
        %509 = vmatprep.subr.bf16.mxu0 0
        %510 = vmatpush1.bf16.msra.mxu0 0
        %511 = vmatprep.subr.bf16.mxu0 0
        %512 = vmatpush1.bf16.msra.mxu0 0
        %513 = vmatprep.subr.bf16.mxu0 0
        %514 = vmatpush1.bf16.msra.mxu0 0
        %515 = vmatprep.subr.bf16.mxu0 0
        %516 = vmatpush1.bf16.msra.mxu0 0
        %517 = vmatprep.subr.bf16.mxu0 0
        %518 = vmatpush1.bf16.msra.mxu0 0
        %519 = vmatprep.subr.bf16.mxu0 0
        %520 = vmatpush1.bf16.msra.mxu0 0
        %521 = vmatprep.subr.bf16.mxu0 0
        %522 = vmatpush1.bf16.msra.mxu0 0
        %523 = vmatprep.subr.bf16.mxu0 0
        %524 = vmatpush1.bf16.msra.mxu0 0
        %525 = vmatprep.subr.bf16.mxu0 0
        %526 = vmatpush1.bf16.msra.mxu0 0
        %527 = vmatprep.subr.bf16.mxu0 0
        %528 = vmatpush1.bf16.msra.mxu0 0
        %529 = vmatprep.subr.bf16.mxu0 0
        %530 = vmatpush1.bf16.msra.mxu0 0
        %531 = vmatprep.subr.bf16.mxu0 0
        %532 = vmatpush1.bf16.msra.mxu0 0
        %533 = vmatprep.mubr.bf16.mxu0 0
        %534 = vmatmul.mubr.bf16.gmra.mrb[0].mxu0 %v490
        %v535 = vpop.f32.mrb[0].mxu0
        %v536 = vadd.f32 %v458, %v535
        %v537 = vpop.f32.mrb[0].mxu0
        %v538 = vpop.f32.mrb[0].mxu0
        %v539 = vadd.f32 %v462, %v538
        %v540 = vpop.f32.mrb[0].mxu0
        %541 = vmatprep.mubr.bf16.mxu0 0
        %542 = vmatmul.mubr.bf16.gmra.mrb[0].mxu0 %v493
        %v543 = vpop.f32.mrb[0].mxu0
        %v544 = vadd.f32 %v466, %v543
        %v545 = vpop.f32.mrb[0].mxu0
        %v546 = vpop.f32.mrb[0].mxu0
        %v547 = vadd.f32 %v470, %v546
        %v548 = vpop.f32.mrb[0].mxu0
        %549 = vmatprep.mubr.bf16.mxu0 0
        %550 = vmatmul.mubr.bf16.gmra.mrb[0].mxu0 %v496
        %v551 = vpop.f32.mrb[0].mxu0
        %v552 = vadd.f32 %v474, %v551
        %v553 = vpop.f32.mrb[0].mxu0
        %v554 = vpop.f32.mrb[0].mxu0
        %v555 = vadd.f32 %v478, %v554
        %v556 = vpop.f32.mrb[0].mxu0
        %557 = vmatprep.mubr.bf16.mxu0 0
        %558 = vmatmul.mubr.bf16.gmra.mrb[0].mxu0 %v499
        %v559 = vpop.f32.mrb[0].mxu0
        %v560 = vadd.f32 %v482, %v559
        %v561 = vpop.f32.mrb[0].mxu0
        %v562 = vpop.f32.mrb[0].mxu0
        %v563 = vadd.f32 %v486, %v562
        %v564 = vpop.f32.mrb[0].mxu0
        %565 = vdwg.mxu0
        %v566 = vmax.f32 %v536, 0.0
        %v567 = vmax.f32 %v539, 0.0
        %v568 = vmax.f32 %v544, 0.0
        %v569 = vmax.f32 %v547, 0.0
        %v570 = vmax.f32 %v552, 0.0
        %v571 = vmax.f32 %v555, 0.0
        %v572 = vmax.f32 %v560, 0.0
        %v573 = vmax.f32 %v563, 0.0
        %574 = vset.pattern.permute.xlu0 2
        %575 = vperm.xlu0 %574, %v246
        %v576 = vpop.permute.xlu0 %575
        %578 = vset.pattern.permute.xlu0 2
        %579 = vperm.xlu0 %578, %v247
        %v580 = vpop.permute.xlu0 %579
        %582 = vset.pattern.permute.xlu0 2
        %583 = vperm.xlu0 %582, %v248
        %v584 = vpop.permute.xlu0 %583
        %586 = vset.pattern.permute.xlu0 2
        %587 = vperm.xlu0 %586, %v249
        %v588 = vpop.permute.xlu0 %587
        %590 = vset.pattern.permute.xlu0 2
        %591 = vperm.xlu0 %590, %v250
        %v592 = vpop.permute.xlu0 %591
        %594 = vset.pattern.permute.xlu0 2
        %595 = vperm.xlu0 %594, %v251
        %v596 = vpop.permute.xlu0 %595
        %598 = vset.pattern.permute.xlu0 2
        %599 = vperm.xlu0 %598, %v252
        %v600 = vpop.permute.xlu0 %599
        %602 = vset.pattern.permute.xlu0 2
        %603 = vperm.xlu0 %602, %v253
        %v604 = vpop.permute.xlu0 %603
        %v606 = vmul.f32 %v566, %v576
        %v607 = vmul.f32 %v567, %v580
        %v608 = vmul.f32 %v568, %v584
        %v609 = vmul.f32 %v569, %v588
        %v610 = vmul.f32 %v570, %v592
        %v611 = vmul.f32 %v571, %v596
        %v612 = vmul.f32 %v572, %v600
        %v613 = vmul.f32 %v573, %v604
        %v614 = vadd.f32 %v606, %v607
        %v615 = vadd.f32 %v614, %v608
        %v616 = vadd.f32 %v615, %v609
        %v617 = vadd.f32 %v616, %v610
        %v618 = vadd.f32 %v617, %v611
        %v619 = vadd.f32 %v618, %v612
        %v620 = vadd.f32 %v619, %v613
        %v621 = vrot.slane %v620, 4
        %v622 = vadd.f32 %v620, %v621
        %v623 = vrot.slane %v622, 2
        %v624 = vadd.f32 %v622, %v623
        %v625 = vrot.slane %v624, 1
        %v626 = vadd.f32 %v624, %v625
        %s627 = sld [smem:[#allocation2]]
        %v628 = vstv %s627
        %v629 = vadd.f32 %v626, %v628
        %630 = vst [vmem:[%s230] sm:$0x1] %v629
        %s631 = sand.u32 %s138, 1
        %s632 = scalar_lea.sflag [#allocation4], %s631
        %s633 = sand.u32 %s138, 1
        %s634 = scalar_lea.vmem [#allocation3], %s633
        // Predicated region
        $region41: #{vnetwork_forward.1} parent=39 // pred_check
          %p635 = pneg %p148
        $region42: #{vnetwork_forward.1} parent=39 // pred_check_branch
          %637 = sbr.rel (%p635) target = $region44
        $region43: #{vnetwork_forward.1} parent=39 // pred_region
          %s639 = ssub.s32 16, 16
          %640 = vsyncadd %s632, %s639
          %s641 = smul.addr %s20, 16
          %s642 = scalar_lea.hbm %s5, %s641
          %s644 = sshll.u32 %s634, 4
          %s645 = int_to_ptr.vmem [resolvable:$true] %s644
          %647 = dma.vmem_to_hbm [thread:$0]  %s645, 16, %s642, %s632
        $region44: #{vnetwork_forward.1} parent=39 // pred_fallthru
          _
      $region40: #{vnetwork_forward.1} parent=5 // pred_fallthru
        _
      %p648 = scmp.le.s32.totalorder 2, %s15
      // Predicated region
      $region45: #{vnetwork_forward.1} parent=5 // pred_check
        %p649 = pneg %p648
      $region46: #{vnetwork_forward.1} parent=5 // pred_check_branch
        %651 = sbr.rel (%p649) target = $region48
      $region47: #{vnetwork_forward.1} parent=5 // pred_region
        %s652 = ssub.s32 %s15, 2
        // Predicated region
        $region49: #{vnetwork_forward.1} parent=47 // pred_check
          %p653 = pneg %p154
        $region50: #{vnetwork_forward.1} parent=47 // pred_check_branch
          %655 = sbr.rel (%p653) target = $region52
        $region51: #{vnetwork_forward.1} parent=47 // pred_region
          %s656 = sand.u32 %s139, 1
          %s657 = scalar_lea.sflag [#allocation4], %s656
          %s658 = sand.u32 %s139, 1
          %s659 = scalar_lea.vmem [#allocation3], %s658
          %660 = dma.done %s657, 16
        $region52: #{vnetwork_forward.1} parent=47 // pred_fallthru
          _
      $region48: #{vnetwork_forward.1} parent=5 // pred_fallthru
        _
    $region6: #{vnetwork_forward.1} parent=1 // loop_footer
      %s19 = sadd.s32 1, %s15
    $region7: #{vnetwork_forward.1} parent=1 // loop_footer_branch
      %14 = sbr.rel target = $region3
    $region8: #{vnetwork_forward.1} parent=1 // loop_exit
      _
    %661 = vsyncpa [#allocation4], 1
    %s662 = scalar_lea.sflag [#allocation4], 1
    %663 = vsyncpa %s662, 1

</llo_original>
